<compile_context>
chip_gen: v6e
topology: v6e:2x2x1
jax: 0.10.0
libtpu: 0.0.40
codegen_flags: <defaults>
</compile_context>

<pallas_src>
import functools

import jax
import jax.numpy as jnp
import numpy as np
from jax.experimental import pallas as pl
from jax.experimental.pallas import tpu as pltpu

SEG_WEIGHT = 1.0
ATT_WEIGHT = 0.1

LANES = 512                      # lane-dense slab width (multiple of 128)
STRIPE = 32                      # in-kernel stripe rows (aligned for f32/bf16/int8 tiling)
PALLAS_MIN_ELEMS = 32 * LANES    # below this a pallas launch costs more than the work
TARGET_BLOCK_BYTES = 2 << 20     # ~2 MiB/input buffer -> 1024 f32 rows / 2048 bf16 rows
INPUT_VMEM_BUDGET = 16 << 20     # (inputs x 2 buffers) budget, v5e-safe
VMEM_LIMIT_BYTES = 32 << 20


# ---------------- device / plan helpers ----------------

@functools.lru_cache(maxsize=1)
def _num_tensorcores():
    try:
        kind = jax.devices()[0].device_kind.lower()
    except Exception:
        return 1
    # v7x (and v4/v5p megacore) expose 2 TensorCores behind one device; on
    # single-TC v5e/v6e a 2-way grid split is pure overhead, so use 1 there.
    return 2 if any(m in kind for m in ("v7", "v4", "v5p")) else 1


def _mosaic_params():
    return pltpu.CompilerParams(
        dimension_semantics=("parallel", "arbitrary"),
        vmem_limit_bytes=VMEM_LIMIT_BYTES)


def _plan(rows, itemsize, n_inputs, n_cores):
    """Pick (tile_rows, tiles_per_core, tiles_needed, exact) for a [rows, LANES] slab."""
    blk_bytes = min(TARGET_BLOCK_BYTES, INPUT_VMEM_BUDGET // (2 * n_inputs))
    max_rows = max(STRIPE, (blk_bytes // (LANES * itemsize)) // STRIPE * STRIPE)
    tile_rows = max(STRIPE, min(max_rows, rows // STRIPE * STRIPE))
    tiles_needed = -(-rows // tile_rows)
    tiles_per_core = -(-tiles_needed // n_cores)
    exact = (rows % tile_rows == 0) and (n_cores * tiles_per_core == tiles_needed)
    return tile_rows, tiles_per_core, tiles_needed, exact


def _in_index_map(tiles_per_core, tiles_needed, exact):
    if exact:
        return lambda c, i: (c * tiles_per_core + i, 0)
    last = tiles_needed - 1
    # Clamp fully-out-of-range tiles (odd tile counts split across 2 cores) onto
    # the last real tile; the kernel's row-validity mask zeroes their contribution.
    return lambda c, i: (jnp.minimum(c * tiles_per_core + i, last), 0)


# ---------------- kernels ----------------

def _fold8(x):
    """(R, LANES) f32 with R % 8 == 0 -> (8, LANES) partial sums (VPU adds only)."""
    r = x.shape[0]
    return x if r == 8 else jnp.sum(x.reshape(r // 8, 8, x.shape[1]), axis=0)


def _make_seg_kernel(rows, tile_rows, tiles_per_core, exact):
    """BCE + Dice partial sums; out block (1, 4, 8, LANES) f32 is resident across
    the reduction axis: [0]=sum BCE terms, [1]=sum(p*t), [2]=sum(p), [3]=sum(t)."""
    n_stripes = tile_rows // STRIPE

    def kernel(p_ref, t_ref, out_ref):
        if not exact:
            tile_idx = pl.program_id(0) * tiles_per_core + pl.program_id(1)
            base = tile_idx * tile_rows + jax.lax.broadcasted_iota(
                jnp.int32, (STRIPE, LANES), 0)

        def body(s, carry):
            bce_a, pt_a, p_a, t_a = carry
            r = pl.multiple_of(s * STRIPE, STRIPE)
            p = p_ref[pl.ds(r, STRIPE), :].astype(jnp.float32)
            t = t_ref[pl.ds(r, STRIPE), :].astype(jnp.float32)
            if not exact:
                valid = (base + r) < rows
                # Forcing (p, t) -> 0 on padded rows makes every partial 0 there.
                p = jnp.where(valid, p, 0.0)
                t = jnp.where(valid, t, 0.0)
            # torch.nn.BCELoss semantics: log terms clamped at -100.
            logp = jnp.maximum(jnp.log(p), -100.0)
            log1mp = jnp.maximum(jnp.log(1.0 - p), -100.0)
            bce = -(t * (logp - log1mp) + log1mp)   # == -(t*logp + (1-t)*log1mp)
            return (bce_a + _fold8(bce), pt_a + _fold8(p * t),
                    p_a + _fold8(p), t_a + _fold8(t))

        z = jnp.zeros((8, LANES), jnp.float32)
        bce_s, pt_s, p_s, t_s = jax.lax.fori_loop(0, n_stripes, body, (z, z, z, z))

        @pl.when(pl.program_id(1) == 0)
        def _():
            out_ref[...] = jnp.zeros_like(out_ref)
        out_ref[0, 0] += bce_s
        out_ref[0, 1] += pt_s
        out_ref[0, 2] += p_s
        out_ref[0, 3] += t_s

    return kernel


def _make_abs_sum_kernel(n_in, rows, tile_rows, tiles_per_core, exact):
    """sum|x| over n_in equally-tiled inputs; out block (1, 8, LANES) f32."""
    n_stripes = tile_rows // STRIPE

    def kernel(*refs):
        x_refs, out_ref = refs[:n_in], refs[n_in]
        if not exact:
            tile_idx = pl.program_id(0) * tiles_per_core + pl.program_id(1)
            base = tile_idx * tile_rows + jax.lax.broadcasted_iota(
                jnp.int32, (STRIPE, LANES), 0)

        def body(s, acc):
            r = pl.multiple_of(s * STRIPE, STRIPE)
            stripe = jnp.abs(x_refs[0][pl.ds(r, STRIPE), :].astype(jnp.float32))
            for xr in x_refs[1:]:
                stripe = stripe + jnp.abs(xr[pl.ds(r, STRIPE), :].astype(jnp.float32))
            if not exact:
                stripe = jnp.where((base + r) < rows, stripe, 0.0)
            return acc + _fold8(stripe)

        acc = jax.lax.fori_loop(0, n_stripes, body, jnp.zeros((8, LANES), jnp.float32))

        @pl.when(pl.program_id(1) == 0)
        def _():
            out_ref[...] = jnp.zeros_like(out_ref)
        out_ref[0] += acc

    return kernel


# ---------------- wrappers ----------------

def _seg_sums_jnp(p, t):
    p = p.astype(jnp.float32).reshape(-1)
    t = t.astype(jnp.float32).reshape(-1)
    logp = jnp.maximum(jnp.log(p), -100.0)
    log1mp = jnp.maximum(jnp.log(1.0 - p), -100.0)
    bce = -(t * (logp - log1mp) + log1mp)
    return jnp.stack([jnp.sum(bce), jnp.sum(p * t), jnp.sum(p), jnp.sum(t)])


def _seg_partial_sums(pred, target):
    """Returns f32[4]: (sum BCE terms, sum p*t, sum p, sum t) over all elements."""
    numel = pred.size
    if numel < PALLAS_MIN_ELEMS:
        return _seg_sums_jnp(pred, target)      # launch overhead > work below this

    p_flat = pred.reshape(-1)
    t_flat = target.reshape(-1)
    main = (numel // LANES) * LANES
    tail = None
    if main != numel:
        # Sub-row remainder (< LANES elems): tiny plain-jnp contribution.
        # TODO(synk): the prefix slice may copy for ragged sizes; real seg maps
        # are multiples of 512 so this path is normally dead.
        tail = _seg_sums_jnp(p_flat[main:], t_flat[main:])
        p_flat, t_flat = p_flat[:main], t_flat[:main]

    rows = main // LANES
    n_cores = _num_tensorcores()
    itemsize = max(p_flat.dtype.itemsize, t_flat.dtype.itemsize)
    tile_rows, tiles_per_core, tiles_needed, exact = _plan(rows, itemsize, 2, n_cores)
    idx = _in_index_map(tiles_per_core, tiles_needed, exact)

    out = pl.pallas_call(
        _make_seg_kernel(rows, tile_rows, tiles_per_core, exact),
        out_shape=jax.ShapeDtypeStruct((n_cores, 4, 8, LANES), jnp.float32),
        grid_spec=pltpu.PrefetchScalarGridSpec(
            num_scalar_prefetch=0,
            grid=(n_cores, tiles_per_core),
            in_specs=[pl.BlockSpec((tile_rows, LANES), idx),
                      pl.BlockSpec((tile_rows, LANES), idx)],
            out_specs=pl.BlockSpec((1, 4, 8, LANES), lambda c, i: (c, 0, 0, 0)),
        ),
        compiler_params=_mosaic_params(),
    )(p_flat.reshape(rows, LANES), t_flat.reshape(rows, LANES))

    sums = jnp.sum(out, axis=(0, 2, 3))          # tiny (128 KiB max) final reduce
    return sums if tail is None else sums + tail


def _abs_sum_group(maps):
    """sum_i sum|maps[i]| for equally-sized maps (numel % LANES == 0), one launch."""
    rows = maps[0].size // LANES
    n_in = len(maps)
    n_cores = _num_tensorcores()
    itemsize = max(m.dtype.itemsize for m in maps)
    tile_rows, tiles_per_core, tiles_needed, exact = _plan(rows, itemsize, n_in, n_cores)
    idx = _in_index_map(tiles_per_core, tiles_needed, exact)

    out = pl.pallas_call(
        _make_abs_sum_kernel(n_in, rows, tile_rows, tiles_per_core, exact),
        out_shape=jax.ShapeDtypeStruct((n_cores, 8, LANES), jnp.float32),
        grid_spec=pltpu.PrefetchScalarGridSpec(
            num_scalar_prefetch=0,
            grid=(n_cores, tiles_per_core),
            in_specs=[pl.BlockSpec((tile_rows, LANES), idx) for _ in range(n_in)],
            out_specs=pl.BlockSpec((1, 8, LANES), lambda c, i: (c, 0, 0)),
        ),
        compiler_params=_mosaic_params(),
    )(*[m.reshape(rows, LANES) for m in maps])
    return jnp.sum(out)


def _cross_entropy_mean(logits, labels):
    # [B, num_classes] is a few hundred bytes; plain jnp — a pallas launch would
    # cost far more than the compute and XLA fuses this fine.
    logits = logits.astype(jnp.float32)
    lse = jax.nn.logsumexp(logits, axis=-1)
    picked = jnp.take_along_axis(
        logits, labels.astype(jnp.int32)[:, None], axis=-1)[:, 0]
    return jnp.mean(lse - picked)


def forgery_detection_loss(pred_class, true_class, pred_seg=None, true_seg=None,
                           attention_maps=None, seg_weight=SEG_WEIGHT,
                           att_weight=ATT_WEIGHT):
    total = _cross_entropy_mean(pred_class, true_class)

    if pred_seg is not None and true_seg is not None:
        bce_sum, inter, sum_p, sum_t = _seg_partial_sums(pred_seg, true_seg)
        bce_mean = bce_sum / jnp.float32(pred_seg.size)
        dice = (2.0 * inter + 1.0) / (sum_p + sum_t + 1.0)   # global dice, smooth=1
        total = total + seg_weight * (bce_mean + (1.0 - dice))

    if attention_maps is not None:
        att_reg = jnp.float32(0.0)
        groups = {}
        for att in attention_maps:
            n = int(att.size)
            if n < PALLAS_MIN_ELEMS or n % LANES != 0:
                att_reg = att_reg + jnp.mean(jnp.abs(att.astype(jnp.float32)))
            else:
                groups.setdefault(n, []).append(att)
        # Equally-sized maps share ONE multi-input launch (no concat copy):
        # sum_i mean|att_i| == (sum over all maps of sum|x|) / per-map numel.
        for n, ms in groups.items():
            att_reg = att_reg + _abs_sum_group(ms) / jnp.float32(n)
        total = total + att_weight * att_reg

    return total


# ---------------- pure-jnp reference (for sanity check) ----------------

def _reference_loss(pred_class, true_class, pred_seg, true_seg, attention_maps):
    logits = pred_class.astype(jnp.float32)
    lse = jax.nn.logsumexp(logits, axis=-1)
    picked = jnp.take_along_axis(logits, true_class.astype(jnp.int32)[:, None], -1)[:, 0]
    total = jnp.mean(lse - picked)
    p = pred_seg.astype(jnp.float32).reshape(-1)
    t = true_seg.astype(jnp.float32).reshape(-1)
    bce = jnp.mean(-(t * jnp.maximum(jnp.log(p), -100.0)
                     + (1.0 - t) * jnp.maximum(jnp.log(1.0 - p), -100.0)))
    dice = (2.0 * jnp.sum(p * t) + 1.0) / (jnp.sum(p) + jnp.sum(t) + 1.0)
    total = total + SEG_WEIGHT * (bce + (1.0 - dice))
    att = sum(jnp.mean(jnp.abs(a.astype(jnp.float32))) for a in attention_maps)
    return total + ATT_WEIGHT * att


# ---------------- demo ----------------

if __name__ == "__main__":
    key = jax.random.PRNGKey(0)
    k1, k2, k3, k4, k5, k6 = jax.random.split(key, 6)

    B, NUM_CLASSES = 2, 2
    pred_class = jax.random.normal(k1, (B, NUM_CLASSES), jnp.float32)         # logits
    true_class = jax.random.randint(k2, (B,), 0, NUM_CLASSES)                 # labels
    # Seg maps sized above the small-input threshold so the Pallas path runs.
    # pred_seg are probabilities (BCELoss expects sigmoid outputs), NCHW layout.
    pred_seg = jax.nn.sigmoid(jax.random.normal(k3, (B, 1, 128, 128), jnp.float32))
    # Binary target mask shipped in a narrow dtype (bf16): native-dtype DMA,
    # cast to f32 in-kernel; 0/1 are exact in bf16 so semantics are unchanged.
    true_seg = (jax.random.uniform(k4, (B, 1, 128, 128)) > 0.5).astype(jnp.bfloat16)
    # Attention maps in bf16: both maps go through ONE multi-input launch.
    attention_maps = [
        jax.random.normal(k5, (B, 4, 64, 64), jnp.float32).astype(jnp.bfloat16),
        jax.random.normal(k6, (B, 4, 64, 64), jnp.float32).astype(jnp.bfloat16),
    ]

    loss_fn = jax.jit(forgery_detection_loss)
    total = loss_fn(pred_class, true_class, pred_seg, true_seg, attention_maps)
    jax.block_until_ready(total)

    ref = _reference_loss(pred_class, true_class, pred_seg, true_seg, attention_maps)
    np.testing.assert_allclose(np.asarray(total), np.asarray(ref), rtol=2e-4, atol=1e-5)
    print("KERNEL_OK")
</pallas_src>

<mosaic_0001>
module attributes {stable_mosaic.version = 11 : i64} {
  func.func @kernel(%arg0: i32, %arg1: i32, %arg2: memref<64x512xf32, #tpu.memory_space<vmem>>, %arg3: memref<64x512xbf16, #tpu.memory_space<vmem>>, %arg4: memref<1x4x8x512xf32, #tpu.memory_space<vmem>>) attributes {dimension_semantics = [#tpu.dimension_semantics<parallel>, #tpu.dimension_semantics<arbitrary>], iteration_bounds = array<i64: 1, 1>, scalar_prefetch = 0 : i64, scratch_operands = 0 : i64, tpu.core_type = #tpu.core_type<tc>, window_params = [{transform_indices = @transform_0, window_bounds = array<i64: 64, 512>}, {transform_indices = @transform_1, window_bounds = array<i64: 64, 512>}, {transform_indices = @transform_2, window_bounds = array<i64: 1, 4, 8, 512>}]} {
    %cst = arith.constant 0.000000e+00 : f32
    %0 = vector.broadcast %cst : f32 to vector<8x512xf32>
    %c0_i32 = arith.constant 0 : i32
    %c2_i32 = arith.constant 2 : i32
    %1 = arith.addi %c0_i32, %c2_i32 : i32
    %c1_i32 = arith.constant 1 : i32
    %2:4 = scf.for %arg5 = %c0_i32 to %1 step %c1_i32 iter_args(%arg6 = %0, %arg7 = %0, %arg8 = %0, %arg9 = %0) -> (vector<8x512xf32>, vector<8x512xf32>, vector<8x512xf32>, vector<8x512xf32>)  : i32 {
      %c32_i32 = arith.constant 32 : i32
      %30 = arith.muli %arg5, %c32_i32 : i32
      %31 = tpu.assume_multiple %30, 32 : i32
      %32 = arith.index_cast %31 : i32 to index
      %c0_31 = arith.constant 0 : index
      %33 = vector.load %arg2[%32, %c0_31] : memref<64x512xf32, #tpu.memory_space<vmem>>, vector<32x512xf32>
      %34 = arith.index_cast %31 : i32 to index
      %c0_32 = arith.constant 0 : index
      %35 = vector.load %arg3[%34, %c0_32] : memref<64x512xbf16, #tpu.memory_space<vmem>>, vector<32x512xbf16>
      %36 = arith.extf %35 : vector<32x512xbf16> to vector<32x512xf32>
      %37 = math.log %33 : vector<32x512xf32>
      %cst_33 = arith.constant -1.000000e+02 : f32
      %38 = vector.broadcast %cst_33 : f32 to vector<32x512xf32>
      %39 = arith.maximumf %37, %38 : vector<32x512xf32>
      %cst_34 = arith.constant 1.000000e+00 : f32
      %40 = vector.broadcast %cst_34 : f32 to vector<32x512xf32>
      %41 = arith.subf %40, %33 : vector<32x512xf32>
      %42 = math.log %41 : vector<32x512xf32>
      %cst_35 = arith.constant -1.000000e+02 : f32
      %43 = vector.broadcast %cst_35 : f32 to vector<32x512xf32>
      %44 = arith.maximumf %42, %43 : vector<32x512xf32>
      %45 = arith.subf %39, %44 : vector<32x512xf32>
      %46 = arith.mulf %36, %45 : vector<32x512xf32>
      %47 = arith.addf %46, %44 : vector<32x512xf32>
      %cst_36 = arith.constant 0.000000e+00 : f32
      %48 = vector.broadcast %cst_36 : f32 to vector<32x512xf32>
      %49 = arith.subf %48, %47 : vector<32x512xf32>
      %50 = vector.shape_cast %49 : vector<32x512xf32> to vector<4x8x512xf32>
      %cst_37 = arith.constant dense<0.000000e+00> : vector<8x512xf32>
      %51 = vector.multi_reduction <add>, %50, %cst_37 [0] : vector<4x8x512xf32> to vector<8x512xf32>
      %52 = arith.addf %arg6, %51 : vector<8x512xf32>
      %53 = arith.mulf %33, %36 : vector<32x512xf32>
      %54 = vector.shape_cast %53 : vector<32x512xf32> to vector<4x8x512xf32>
      %cst_38 = arith.constant dense<0.000000e+00> : vector<8x512xf32>
      %55 = vector.multi_reduction <add>, %54, %cst_38 [0] : vector<4x8x512xf32> to vector<8x512xf32>
      %56 = arith.addf %arg7, %55 : vector<8x512xf32>
      %57 = vector.shape_cast %33 : vector<32x512xf32> to vector<4x8x512xf32>
      %cst_39 = arith.constant dense<0.000000e+00> : vector<8x512xf32>
      %58 = vector.multi_reduction <add>, %57, %cst_39 [0] : vector<4x8x512xf32> to vector<8x512xf32>
      %59 = arith.addf %arg8, %58 : vector<8x512xf32>
      %60 = vector.shape_cast %36 : vector<32x512xf32> to vector<4x8x512xf32>
      %cst_40 = arith.constant dense<0.000000e+00> : vector<8x512xf32>
      %61 = vector.multi_reduction <add>, %60, %cst_40 [0] : vector<4x8x512xf32> to vector<8x512xf32>
      %62 = arith.addf %arg9, %61 : vector<8x512xf32>
      scf.yield %52, %56, %59, %62 : vector<8x512xf32>, vector<8x512xf32>, vector<8x512xf32>, vector<8x512xf32>
    }
    %c2_i32_0 = arith.constant 2 : i32
    %c0_i32_1 = arith.constant 0 : i32
    %3 = arith.cmpi eq, %arg1, %c0_i32_1 : i32
    %4 = arith.extui %3 : i1 to i32
    %c0_i32_2 = arith.constant 0 : i32
    %5 = arith.cmpi ne, %4, %c0_i32_2 : i32
    scf.if %5 {
      %cst_31 = arith.constant 0.000000e+00 : f32
      %30 = vector.broadcast %cst_31 : f32 to vector<1x4x8x512xf32>
      %c0_32 = arith.constant 0 : index
      %c0_33 = arith.constant 0 : index
      %c0_34 = arith.constant 0 : index
      %c0_35 = arith.constant 0 : index
      %31 = vector.load %arg4[%c0_32, %c0_33, %c0_34, %c0_35] : memref<1x4x8x512xf32, #tpu.memory_space<vmem>>, vector<1x4x8x512xf32>
      tpu.vector_store %arg4[%c0_32, %c0_33, %c0_34, %c0_35], %30 {strides = array<i32>} : memref<1x4x8x512xf32, #tpu.memory_space<vmem>>, vector<1x4x8x512xf32>,
    } else {
    }
    %c0 = arith.constant 0 : index
    %c0_3 = arith.constant 0 : index
    %c0_4 = arith.constant 0 : index
    %c0_5 = arith.constant 0 : index
    %6 = vector.load %arg4[%c0, %c0_3, %c0_4, %c0_5] : memref<1x4x8x512xf32, #tpu.memory_space<vmem>>, vector<1x1x8x512xf32>
    %7 = vector.shape_cast %6 : vector<1x1x8x512xf32> to vector<8x512xf32>
    %8 = arith.addf %7, %2#0 : vector<8x512xf32>
    %c0_6 = arith.constant 0 : index
    %c0_7 = arith.constant 0 : index
    %c0_8 = arith.constant 0 : index
    %c0_9 = arith.constant 0 : index
    %9 = vector.load %arg4[%c0_6, %c0_7, %c0_8, %c0_9] : memref<1x4x8x512xf32, #tpu.memory_space<vmem>>, vector<1x1x8x512xf32>
    %10 = vector.shape_cast %9 : vector<1x1x8x512xf32> to vector<8x512xf32>
    %11 = vector.shape_cast %8 : vector<8x512xf32> to vector<1x1x8x512xf32>
    tpu.vector_store %arg4[%c0_6, %c0_7, %c0_8, %c0_9], %11 {strides = array<i32>} : memref<1x4x8x512xf32, #tpu.memory_space<vmem>>, vector<1x1x8x512xf32>,
    %c0_10 = arith.constant 0 : index
    %c1 = arith.constant 1 : index
    %c0_11 = arith.constant 0 : index
    %c0_12 = arith.constant 0 : index
    %12 = vector.load %arg4[%c0_10, %c1, %c0_11, %c0_12] : memref<1x4x8x512xf32, #tpu.memory_space<vmem>>, vector<1x1x8x512xf32>
    %13 = vector.shape_cast %12 : vector<1x1x8x512xf32> to vector<8x512xf32>
    %14 = arith.addf %13, %2#1 : vector<8x512xf32>
    %c0_13 = arith.constant 0 : index
    %c1_14 = arith.constant 1 : index
    %c0_15 = arith.constant 0 : index
    %c0_16 = arith.constant 0 : index
    %15 = vector.load %arg4[%c0_13, %c1_14, %c0_15, %c0_16] : memref<1x4x8x512xf32, #tpu.memory_space<vmem>>, vector<1x1x8x512xf32>
    %16 = vector.shape_cast %15 : vector<1x1x8x512xf32> to vector<8x512xf32>
    %17 = vector.shape_cast %14 : vector<8x512xf32> to vector<1x1x8x512xf32>
    tpu.vector_store %arg4[%c0_13, %c1_14, %c0_15, %c0_16], %17 {strides = array<i32>} : memref<1x4x8x512xf32, #tpu.memory_space<vmem>>, vector<1x1x8x512xf32>,
    %c0_17 = arith.constant 0 : index
    %c2 = arith.constant 2 : index
    %c0_18 = arith.constant 0 : index
    %c0_19 = arith.constant 0 : index
    %18 = vector.load %arg4[%c0_17, %c2, %c0_18, %c0_19] : memref<1x4x8x512xf32, #tpu.memory_space<vmem>>, vector<1x1x8x512xf32>
    %19 = vector.shape_cast %18 : vector<1x1x8x512xf32> to vector<8x512xf32>
    %20 = arith.addf %19, %2#2 : vector<8x512xf32>
    %c0_20 = arith.constant 0 : index
    %c2_21 = arith.constant 2 : index
    %c0_22 = arith.constant 0 : index
    %c0_23 = arith.constant 0 : index
    %21 = vector.load %arg4[%c0_20, %c2_21, %c0_22, %c0_23] : memref<1x4x8x512xf32, #tpu.memory_space<vmem>>, vector<1x1x8x512xf32>
    %22 = vector.shape_cast %21 : vector<1x1x8x512xf32> to vector<8x512xf32>
    %23 = vector.shape_cast %20 : vector<8x512xf32> to vector<1x1x8x512xf32>
    tpu.vector_store %arg4[%c0_20, %c2_21, %c0_22, %c0_23], %23 {strides = array<i32>} : memref<1x4x8x512xf32, #tpu.memory_space<vmem>>, vector<1x1x8x512xf32>,
    %c0_24 = arith.constant 0 : index
    %c3 = arith.constant 3 : index
    %c0_25 = arith.constant 0 : index
    %c0_26 = arith.constant 0 : index
    %24 = vector.load %arg4[%c0_24, %c3, %c0_25, %c0_26] : memref<1x4x8x512xf32, #tpu.memory_space<vmem>>, vector<1x1x8x512xf32>
    %25 = vector.shape_cast %24 : vector<1x1x8x512xf32> to vector<8x512xf32>
    %26 = arith.addf %25, %2#3 : vector<8x512xf32>
    %c0_27 = arith.constant 0 : index
    %c3_28 = arith.constant 3 : index
    %c0_29 = arith.constant 0 : index
    %c0_30 = arith.constant 0 : index
    %27 = vector.load %arg4[%c0_27, %c3_28, %c0_29, %c0_30] : memref<1x4x8x512xf32, #tpu.memory_space<vmem>>, vector<1x1x8x512xf32>
    %28 = vector.shape_cast %27 : vector<1x1x8x512xf32> to vector<8x512xf32>
    %29 = vector.shape_cast %26 : vector<8x512xf32> to vector<1x1x8x512xf32>
    tpu.vector_store %arg4[%c0_27, %c3_28, %c0_29, %c0_30], %29 {strides = array<i32>} : memref<1x4x8x512xf32, #tpu.memory_space<vmem>>, vector<1x1x8x512xf32>,
    return
  }
  func.func @transform_0(%arg0: i32, %arg1: i32) -> (i32, i32) {
    %c1_i32 = arith.constant 1 : i32
    %0 = arith.muli %arg0, %c1_i32 : i32
    %1 = arith.addi %0, %arg1 : i32
    %c0_i32 = arith.constant 0 : i32
    %c0_i32_0 = arith.constant 0 : i32
    return %1, %c0_i32 : i32, i32
  }
  func.func @transform_1(%arg0: i32, %arg1: i32) -> (i32, i32) {
    %c1_i32 = arith.constant 1 : i32
    %0 = arith.muli %arg0, %c1_i32 : i32
    %1 = arith.addi %0, %arg1 : i32
    %c0_i32 = arith.constant 0 : i32
    %c0_i32_0 = arith.constant 0 : i32
    return %1, %c0_i32 : i32, i32
  }
  func.func @transform_2(%arg0: i32, %arg1: i32) -> (i32, i32, i32, i32) {
    %c0_i32 = arith.constant 0 : i32
    %c0_i32_0 = arith.constant 0 : i32
    %c0_i32_1 = arith.constant 0 : i32
    %c0_i32_2 = arith.constant 0 : i32
    return %arg0, %c0_i32, %c0_i32_0, %c0_i32_1 : i32, i32, i32, i32
  }
}

module attributes {stable_mosaic.version = 11 : i64} {
  func.func @kernel(%arg0: i32, %arg1: i32, %arg2: memref<64x512xbf16, #tpu.memory_space<vmem>>, %arg3: memref<64x512xbf16, #tpu.memory_space<vmem>>, %arg4: memref<1x8x512xf32, #tpu.memory_space<vmem>>) attributes {dimension_semantics = [#tpu.dimension_semantics<parallel>, #tpu.dimension_semantics<arbitrary>], iteration_bounds = array<i64: 1, 1>, scalar_prefetch = 0 : i64, scratch_operands = 0 : i64, tpu.core_type = #tpu.core_type<tc>, window_params = [{transform_indices = @transform_0, window_bounds = array<i64: 64, 512>}, {transform_indices = @transform_1, window_bounds = array<i64: 64, 512>}, {transform_indices = @transform_2, window_bounds = array<i64: 1, 8, 512>}]} {
    %cst = arith.constant 0.000000e+00 : f32
    %0 = vector.broadcast %cst : f32 to vector<8x512xf32>
    %c0_i32 = arith.constant 0 : i32
    %c2_i32 = arith.constant 2 : i32
    %1 = arith.addi %c0_i32, %c2_i32 : i32
    %c1_i32 = arith.constant 1 : i32
    %2 = scf.for %arg5 = %c0_i32 to %1 step %c1_i32 iter_args(%arg6 = %0) -> (vector<8x512xf32>)  : i32 {
      %c32_i32 = arith.constant 32 : i32
      %12 = arith.muli %arg5, %c32_i32 : i32
      %13 = tpu.assume_multiple %12, 32 : i32
      %14 = arith.index_cast %13 : i32 to index
      %c0_8 = arith.constant 0 : index
      %15 = vector.load %arg2[%14, %c0_8] : memref<64x512xbf16, #tpu.memory_space<vmem>>, vector<32x512xbf16>
      %16 = arith.extf %15 : vector<32x512xbf16> to vector<32x512xf32>
      %17 = math.absf %16 : vector<32x512xf32>
      %18 = arith.index_cast %13 : i32 to index
      %c0_9 = arith.constant 0 : index
      %19 = vector.load %arg3[%18, %c0_9] : memref<64x512xbf16, #tpu.memory_space<vmem>>, vector<32x512xbf16>
      %20 = arith.extf %19 : vector<32x512xbf16> to vector<32x512xf32>
      %21 = math.absf %20 : vector<32x512xf32>
      %22 = arith.addf %17, %21 : vector<32x512xf32>
      %23 = vector.shape_cast %22 : vector<32x512xf32> to vector<4x8x512xf32>
      %cst_10 = arith.constant dense<0.000000e+00> : vector<8x512xf32>
      %24 = vector.multi_reduction <add>, %23, %cst_10 [0] : vector<4x8x512xf32> to vector<8x512xf32>
      %25 = arith.addf %arg6, %24 : vector<8x512xf32>
      scf.yield %25 : vector<8x512xf32>
    }
    %c2_i32_0 = arith.constant 2 : i32
    %c0_i32_1 = arith.constant 0 : i32
    %3 = arith.cmpi eq, %arg1, %c0_i32_1 : i32
    %4 = arith.extui %3 : i1 to i32
    %c0_i32_2 = arith.constant 0 : i32
    %5 = arith.cmpi ne, %4, %c0_i32_2 : i32
    scf.if %5 {
      %cst_8 = arith.constant 0.000000e+00 : f32
      %12 = vector.broadcast %cst_8 : f32 to vector<1x8x512xf32>
      %c0_9 = arith.constant 0 : index
      %c0_10 = arith.constant 0 : index
      %c0_11 = arith.constant 0 : index
      %13 = vector.load %arg4[%c0_9, %c0_10, %c0_11] : memref<1x8x512xf32, #tpu.memory_space<vmem>>, vector<1x8x512xf32>
      tpu.vector_store %arg4[%c0_9, %c0_10, %c0_11], %12 {strides = array<i32>} : memref<1x8x512xf32, #tpu.memory_space<vmem>>, vector<1x8x512xf32>,
    } else {
    }
    %c0 = arith.constant 0 : index
    %c0_3 = arith.constant 0 : index
    %c0_4 = arith.constant 0 : index
    %6 = vector.load %arg4[%c0, %c0_3, %c0_4] : memref<1x8x512xf32, #tpu.memory_space<vmem>>, vector<1x8x512xf32>
    %7 = vector.shape_cast %6 : vector<1x8x512xf32> to vector<8x512xf32>
    %8 = arith.addf %7, %2 : vector<8x512xf32>
    %c0_5 = arith.constant 0 : index
    %c0_6 = arith.constant 0 : index
    %c0_7 = arith.constant 0 : index
    %9 = vector.load %arg4[%c0_5, %c0_6, %c0_7] : memref<1x8x512xf32, #tpu.memory_space<vmem>>, vector<1x8x512xf32>
    %10 = vector.shape_cast %9 : vector<1x8x512xf32> to vector<8x512xf32>
    %11 = vector.shape_cast %8 : vector<8x512xf32> to vector<1x8x512xf32>
    tpu.vector_store %arg4[%c0_5, %c0_6, %c0_7], %11 {strides = array<i32>} : memref<1x8x512xf32, #tpu.memory_space<vmem>>, vector<1x8x512xf32>,
    return
  }
  func.func @transform_0(%arg0: i32, %arg1: i32) -> (i32, i32) {
    %c1_i32 = arith.constant 1 : i32
    %0 = arith.muli %arg0, %c1_i32 : i32
    %1 = arith.addi %0, %arg1 : i32
    %c0_i32 = arith.constant 0 : i32
    %c0_i32_0 = arith.constant 0 : i32
    return %1, %c0_i32 : i32, i32
  }
  func.func @transform_1(%arg0: i32, %arg1: i32) -> (i32, i32) {
    %c1_i32 = arith.constant 1 : i32
    %0 = arith.muli %arg0, %c1_i32 : i32
    %1 = arith.addi %0, %arg1 : i32
    %c0_i32 = arith.constant 0 : i32
    %c0_i32_0 = arith.constant 0 : i32
    return %1, %c0_i32 : i32, i32
  }
  func.func @transform_2(%arg0: i32, %arg1: i32) -> (i32, i32, i32) {
    %c0_i32 = arith.constant 0 : i32
    %c0_i32_0 = arith.constant 0 : i32
    %c0_i32_1 = arith.constant 0 : i32
    return %arg0, %c0_i32, %c0_i32_0 : i32, i32, i32
  }
}

</mosaic_0001>

<llo_original>
// kernel: forgery_detection_loss.2
$region0: #{forgery_detection_loss.2}
  #allocation0 [shape = 'u32[]', space=smem, size = 0x4, offset = 0x4, fixed_abs, tag = 'smem constant byte address 0x4 - core index']
  #allocation1 [shape = 'u32[144,128]{1,0:T(1,128)}', space=vmem, size = 0x12000, scoped, tag = 'internal scratch']
  %s0 = inlined_call_operand.vmem [shape: f32[64,512], index: 0, kind: input, shape index: {}]
  %s1 = inlined_call_operand.vmem [shape: bf16[64,512], index: 1, kind: input, shape index: {}]
  %s2 = inlined_call_operand.vmem [shape: f32[1,4,8,512], index: 2, kind: output, shape index: {}]
  %s3 = sld [smem:[#allocation0]]
  $region29: #{forgery_detection_loss.2} parent=0
    _
  %s5 = ssub.s32 1, %s3
  %s6 = scalar_select 0, %s5, %s3
  // Predicated region
  $region2: #{forgery_detection_loss.2} parent=0 // pred_check
    _
  $region3: #{forgery_detection_loss.2} parent=0 // pred_check_branch
    %8 = sbr.rel (0) target = $region5
  $region4: #{forgery_detection_loss.2} parent=0 // pred_region
    %s9 = sadd.s32 0, 0
    %s10 = smul.u32 8, %s9
    %p11 = scmp.lt.s32.totalorder %s10, 7
    %s12 = scalar_select %p11, %s10, 7
    %s13 = smul.addr %s12, 4
    %s14 = smul.addr %s13, 8
    %s15 = scalar_lea.vmem %s0, %s14
    %s16 = sadd.s32 0, 0
    %s17 = smul.u32 8, %s16
  $region5: #{forgery_detection_loss.2} parent=0 // pred_fallthru
    _
  // Predicated region
  $region6: #{forgery_detection_loss.2} parent=0 // pred_check
    _
  $region7: #{forgery_detection_loss.2} parent=0 // pred_check_branch
    %19 = sbr.rel (0) target = $region9
  $region8: #{forgery_detection_loss.2} parent=0 // pred_region
    %s20 = sadd.s32 0, 0
    %s21 = smul.u32 8, %s20
    %p22 = scmp.lt.s32.totalorder %s21, 7
    %s23 = scalar_select %p22, %s21, 7
    %s24 = smul.addr %s23, 4
    %s25 = smul.addr %s24, 4
    %s26 = scalar_lea.vmem %s1, %s25
    %s27 = sadd.s32 0, 0
    %s28 = smul.u32 8, %s27
  $region9: #{forgery_detection_loss.2} parent=0 // pred_fallthru
    _
  %s29 = sadd.s32 0, 0
  %s30 = smul.u32 8, %s29
  %p31 = scmp.lt.s32.totalorder %s30, 7
  %s32 = scalar_select %p31, %s30, 7
  %s33 = smul.addr %s32, 4
  %s34 = smul.addr %s33, 8
  %s35 = scalar_lea.vmem %s0, %s34
  %s36 = sadd.s32 0, 0
  %s37 = smul.u32 8, %s36
  %p38 = scmp.lt.s32.totalorder %s37, 7
  %s39 = scalar_select %p38, %s37, 7
  %s40 = smul.addr %s39, 4
  %s41 = smul.addr %s40, 4
  %s42 = scalar_lea.vmem %s1, %s41
  %s43 = sadd.s32 0, 0
  %s44 = smul.u32 8, %s43
  %p45 = scmp.lt.s32.totalorder %s44, 7
  %s46 = scalar_select %p45, %s44, 7
  %s47 = smul.addr %s46, 4
  %s48 = smul.addr %s47, 8
  %s49 = scalar_lea.vmem %s0, %s48
  %s50 = sadd.s32 0, 0
  %s51 = smul.u32 8, %s50
  %s52 = sadd.s32 0, 0
  %s53 = smul.u32 8, %s52
  %p54 = scmp.lt.s32.totalorder %s53, 7
  %s55 = scalar_select %p54, %s53, 7
  %s56 = smul.addr %s55, 4
  %s57 = smul.addr %s56, 4
  %s58 = scalar_lea.vmem %s1, %s57
  %s59 = sadd.s32 0, 0
  %s60 = smul.u32 8, %s59
  loop: start=0, step=1, limit=2
  $region10: #{forgery_detection_loss.2} parent=0 // loop_pre_header
    _
  $region11: #{forgery_detection_loss.2} parent=0 // loop_header
    %s62 = sphi 0, %s66
    %p63 = scmp.ge.s32.totalorder %s62, 2
    %v67 = vphi 0.0, %v319
    %v68 = vphi 0.0, %v320
    %v69 = vphi 0.0, %v321
    %v70 = vphi 0.0, %v322
    %v71 = vphi 0.0, %v351
    %v72 = vphi 0.0, %v352
    %v73 = vphi 0.0, %v353
    %v74 = vphi 0.0, %v354
    %v75 = vphi 0.0, %v367
    %v76 = vphi 0.0, %v368
    %v77 = vphi 0.0, %v369
    %v78 = vphi 0.0, %v370
    %v79 = vphi 0.0, %v383
    %v80 = vphi 0.0, %v384
    %v81 = vphi 0.0, %v385
    %v82 = vphi 0.0, %v386
  $region12: #{forgery_detection_loss.2} parent=0 // loop_header_branch
    %65 = sbr.rel (%p63) target = $region16
  $region13: #{forgery_detection_loss.2} parent=0 // loop_body
    %s83 = smul.u32 %s62, 32
    %s84 = sshra.s32 %s83, 3
    %s85 = sand.u32 %s83, 7
    %s86 = smul.u32 %s84, 4
    %s87 = smul.addr %s86, 8
    %s88 = scalar_lea.vmem %s49, %s87
    %v89 = vld [vmem:[%s88] sm:$0xff]
    %v90 = vld [vmem:[%s88 + $0x8] sm:$0xff]
    %v91 = vld [vmem:[%s88 + $0x10] sm:$0xff]
    %v92 = vld [vmem:[%s88 + $0x18] sm:$0xff]
    %v93 = vld [vmem:[%s88 + $0x20] sm:$0xff]
    %v94 = vld [vmem:[%s88 + $0x28] sm:$0xff]
    %v95 = vld [vmem:[%s88 + $0x30] sm:$0xff]
    %v96 = vld [vmem:[%s88 + $0x38] sm:$0xff]
    %v97 = vld [vmem:[%s88 + $0x40] sm:$0xff]
    %v98 = vld [vmem:[%s88 + $0x48] sm:$0xff]
    %v99 = vld [vmem:[%s88 + $0x50] sm:$0xff]
    %v100 = vld [vmem:[%s88 + $0x58] sm:$0xff]
    %v101 = vld [vmem:[%s88 + $0x60] sm:$0xff]
    %v102 = vld [vmem:[%s88 + $0x68] sm:$0xff]
    %v103 = vld [vmem:[%s88 + $0x70] sm:$0xff]
    %v104 = vld [vmem:[%s88 + $0x78] sm:$0xff]
    %s105 = smul.addr %s86, 4
    %s106 = scalar_lea.vmem %s58, %s105
    %v107 = vld [vmem:[%s106] sm:$0xff]
    %v108 = vld [vmem:[%s106 + $0x8] sm:$0xff]
    %v109 = vld [vmem:[%s106 + $0x10] sm:$0xff]
    %v110 = vld [vmem:[%s106 + $0x18] sm:$0xff]
    %v111 = vld [vmem:[%s106 + $0x20] sm:$0xff]
    %v112 = vld [vmem:[%s106 + $0x28] sm:$0xff]
    %v113 = vld [vmem:[%s106 + $0x30] sm:$0xff]
    %v114 = vld [vmem:[%s106 + $0x38] sm:$0xff]
    %v115 = vunpack.c.l.bf16 %v107
    %v116 = vunpack.c.h.bf16 %v107
    %v117 = vunpack.c.l.bf16 %v108
    %v118 = vunpack.c.h.bf16 %v108
    %v119 = vunpack.c.l.bf16 %v109
    %v120 = vunpack.c.h.bf16 %v109
    %v121 = vunpack.c.l.bf16 %v110
    %v122 = vunpack.c.h.bf16 %v110
    %v123 = vunpack.c.l.bf16 %v111
    %v124 = vunpack.c.h.bf16 %v111
    %v125 = vunpack.c.l.bf16 %v112
    %v126 = vunpack.c.h.bf16 %v112
    %v127 = vunpack.c.l.bf16 %v113
    %v128 = vunpack.c.h.bf16 %v113
    %v129 = vunpack.c.l.bf16 %v114
    %v130 = vunpack.c.h.bf16 %v114
    %v131 = vlog2.pop %v89
    %v132 = vmul.f32 %v131, 0.6931472
    %v133 = vlog2.pop %v90
    %v134 = vmul.f32 %v133, 0.6931472
    %v135 = vlog2.pop %v91
    %v136 = vmul.f32 %v135, 0.6931472
    %v137 = vlog2.pop %v92
    %v138 = vmul.f32 %v137, 0.6931472
    %v139 = vlog2.pop %v93
    %v140 = vmul.f32 %v139, 0.6931472
    %v141 = vlog2.pop %v94
    %v142 = vmul.f32 %v141, 0.6931472
    %v143 = vlog2.pop %v95
    %v144 = vmul.f32 %v143, 0.6931472
    %v145 = vlog2.pop %v96
    %v146 = vmul.f32 %v145, 0.6931472
    %v147 = vlog2.pop %v97
    %v148 = vmul.f32 %v147, 0.6931472
    %v149 = vlog2.pop %v98
    %v150 = vmul.f32 %v149, 0.6931472
    %v151 = vlog2.pop %v99
    %v152 = vmul.f32 %v151, 0.6931472
    %v153 = vlog2.pop %v100
    %v154 = vmul.f32 %v153, 0.6931472
    %v155 = vlog2.pop %v101
    %v156 = vmul.f32 %v155, 0.6931472
    %v157 = vlog2.pop %v102
    %v158 = vmul.f32 %v157, 0.6931472
    %v159 = vlog2.pop %v103
    %v160 = vmul.f32 %v159, 0.6931472
    %v161 = vlog2.pop %v104
    %v162 = vmul.f32 %v161, 0.6931472
    %v163 = vmax.f32 %v132, -100.0
    %v164 = vmax.f32 %v134, -100.0
    %v165 = vmax.f32 %v136, -100.0
    %v166 = vmax.f32 %v138, -100.0
    %v167 = vmax.f32 %v140, -100.0
    %v168 = vmax.f32 %v142, -100.0
    %v169 = vmax.f32 %v144, -100.0
    %v170 = vmax.f32 %v146, -100.0
    %v171 = vmax.f32 %v148, -100.0
    %v172 = vmax.f32 %v150, -100.0
    %v173 = vmax.f32 %v152, -100.0
    %v174 = vmax.f32 %v154, -100.0
    %v175 = vmax.f32 %v156, -100.0
    %v176 = vmax.f32 %v158, -100.0
    %v177 = vmax.f32 %v160, -100.0
    %v178 = vmax.f32 %v162, -100.0
    %v179 = vsub.f32 1.0, %v89
    %v180 = vsub.f32 1.0, %v90
    %v181 = vsub.f32 1.0, %v91
    %v182 = vsub.f32 1.0, %v92
    %v183 = vsub.f32 1.0, %v93
    %v184 = vsub.f32 1.0, %v94
    %v185 = vsub.f32 1.0, %v95
    %v186 = vsub.f32 1.0, %v96
    %v187 = vsub.f32 1.0, %v97
    %v188 = vsub.f32 1.0, %v98
    %v189 = vsub.f32 1.0, %v99
    %v190 = vsub.f32 1.0, %v100
    %v191 = vsub.f32 1.0, %v101
    %v192 = vsub.f32 1.0, %v102
    %v193 = vsub.f32 1.0, %v103
    %v194 = vsub.f32 1.0, %v104
    %v195 = vlog2.pop %v179
    %v196 = vmul.f32 %v195, 0.6931472
    %v197 = vlog2.pop %v180
    %v198 = vmul.f32 %v197, 0.6931472
    %v199 = vlog2.pop %v181
    %v200 = vmul.f32 %v199, 0.6931472
    %v201 = vlog2.pop %v182
    %v202 = vmul.f32 %v201, 0.6931472
    %v203 = vlog2.pop %v183
    %v204 = vmul.f32 %v203, 0.6931472
    %v205 = vlog2.pop %v184
    %v206 = vmul.f32 %v205, 0.6931472
    %v207 = vlog2.pop %v185
    %v208 = vmul.f32 %v207, 0.6931472
    %v209 = vlog2.pop %v186
    %v210 = vmul.f32 %v209, 0.6931472
    %v211 = vlog2.pop %v187
    %v212 = vmul.f32 %v211, 0.6931472
    %v213 = vlog2.pop %v188
    %v214 = vmul.f32 %v213, 0.6931472
    %v215 = vlog2.pop %v189
    %v216 = vmul.f32 %v215, 0.6931472
    %v217 = vlog2.pop %v190
    %v218 = vmul.f32 %v217, 0.6931472
    %v219 = vlog2.pop %v191
    %v220 = vmul.f32 %v219, 0.6931472
    %v221 = vlog2.pop %v192
    %v222 = vmul.f32 %v221, 0.6931472
    %v223 = vlog2.pop %v193
    %v224 = vmul.f32 %v223, 0.6931472
    %v225 = vlog2.pop %v194
    %v226 = vmul.f32 %v225, 0.6931472
    %v227 = vmax.f32 %v196, -100.0
    %v228 = vmax.f32 %v198, -100.0
    %v229 = vmax.f32 %v200, -100.0
    %v230 = vmax.f32 %v202, -100.0
    %v231 = vmax.f32 %v204, -100.0
    %v232 = vmax.f32 %v206, -100.0
    %v233 = vmax.f32 %v208, -100.0
    %v234 = vmax.f32 %v210, -100.0
    %v235 = vmax.f32 %v212, -100.0
    %v236 = vmax.f32 %v214, -100.0
    %v237 = vmax.f32 %v216, -100.0
    %v238 = vmax.f32 %v218, -100.0
    %v239 = vmax.f32 %v220, -100.0
    %v240 = vmax.f32 %v222, -100.0
    %v241 = vmax.f32 %v224, -100.0
    %v242 = vmax.f32 %v226, -100.0
    %v243 = vsub.f32 %v163, %v227
    %v244 = vsub.f32 %v164, %v228
    %v245 = vsub.f32 %v165, %v229
    %v246 = vsub.f32 %v166, %v230
    %v247 = vsub.f32 %v167, %v231
    %v248 = vsub.f32 %v168, %v232
    %v249 = vsub.f32 %v169, %v233
    %v250 = vsub.f32 %v170, %v234
    %v251 = vsub.f32 %v171, %v235
    %v252 = vsub.f32 %v172, %v236
    %v253 = vsub.f32 %v173, %v237
    %v254 = vsub.f32 %v174, %v238
    %v255 = vsub.f32 %v175, %v239
    %v256 = vsub.f32 %v176, %v240
    %v257 = vsub.f32 %v177, %v241
    %v258 = vsub.f32 %v178, %v242
    %v259 = vmul.f32 %v115, %v243
    %v260 = vmul.f32 %v116, %v244
    %v261 = vmul.f32 %v117, %v245
    %v262 = vmul.f32 %v118, %v246
    %v263 = vmul.f32 %v119, %v247
    %v264 = vmul.f32 %v120, %v248
    %v265 = vmul.f32 %v121, %v249
    %v266 = vmul.f32 %v122, %v250
    %v267 = vmul.f32 %v123, %v251
    %v268 = vmul.f32 %v124, %v252
    %v269 = vmul.f32 %v125, %v253
    %v270 = vmul.f32 %v126, %v254
    %v271 = vmul.f32 %v127, %v255
    %v272 = vmul.f32 %v128, %v256
    %v273 = vmul.f32 %v129, %v257
    %v274 = vmul.f32 %v130, %v258
    %v275 = vadd.f32 %v259, %v227
    %v276 = vadd.f32 %v260, %v228
    %v277 = vadd.f32 %v261, %v229
    %v278 = vadd.f32 %v262, %v230
    %v279 = vadd.f32 %v263, %v231
    %v280 = vadd.f32 %v264, %v232
    %v281 = vadd.f32 %v265, %v233
    %v282 = vadd.f32 %v266, %v234
    %v283 = vadd.f32 %v267, %v235
    %v284 = vadd.f32 %v268, %v236
    %v285 = vadd.f32 %v269, %v237
    %v286 = vadd.f32 %v270, %v238
    %v287 = vadd.f32 %v271, %v239
    %v288 = vadd.f32 %v272, %v240
    %v289 = vadd.f32 %v273, %v241
    %v290 = vadd.f32 %v274, %v242
    %v291 = vsub.f32 0.0, %v275
    %v292 = vsub.f32 0.0, %v276
    %v293 = vsub.f32 0.0, %v277
    %v294 = vsub.f32 0.0, %v278
    %v295 = vsub.f32 0.0, %v279
    %v296 = vsub.f32 0.0, %v280
    %v297 = vsub.f32 0.0, %v281
    %v298 = vsub.f32 0.0, %v282
    %v299 = vsub.f32 0.0, %v283
    %v300 = vsub.f32 0.0, %v284
    %v301 = vsub.f32 0.0, %v285
    %v302 = vsub.f32 0.0, %v286
    %v303 = vsub.f32 0.0, %v287
    %v304 = vsub.f32 0.0, %v288
    %v305 = vsub.f32 0.0, %v289
    %v306 = vsub.f32 0.0, %v290
    %v307 = vadd.f32 %v291, %v295
    %v308 = vadd.f32 %v307, %v299
    %v309 = vadd.f32 %v308, %v303
    %v310 = vadd.f32 %v292, %v296
    %v311 = vadd.f32 %v310, %v300
    %v312 = vadd.f32 %v311, %v304
    %v313 = vadd.f32 %v293, %v297
    %v314 = vadd.f32 %v313, %v301
    %v315 = vadd.f32 %v314, %v305
    %v316 = vadd.f32 %v294, %v298
    %v317 = vadd.f32 %v316, %v302
    %v318 = vadd.f32 %v317, %v306
    %v319 = vadd.f32 %v67, %v309
    %v320 = vadd.f32 %v68, %v312
    %v321 = vadd.f32 %v69, %v315
    %v322 = vadd.f32 %v70, %v318
    %v323 = vmul.f32 %v89, %v115
    %v324 = vmul.f32 %v90, %v116
    %v325 = vmul.f32 %v91, %v117
    %v326 = vmul.f32 %v92, %v118
    %v327 = vmul.f32 %v93, %v119
    %v328 = vmul.f32 %v94, %v120
    %v329 = vmul.f32 %v95, %v121
    %v330 = vmul.f32 %v96, %v122
    %v331 = vmul.f32 %v97, %v123
    %v332 = vmul.f32 %v98, %v124
    %v333 = vmul.f32 %v99, %v125
    %v334 = vmul.f32 %v100, %v126
    %v335 = vmul.f32 %v101, %v127
    %v336 = vmul.f32 %v102, %v128
    %v337 = vmul.f32 %v103, %v129
    %v338 = vmul.f32 %v104, %v130
    %v339 = vadd.f32 %v323, %v327
    %v340 = vadd.f32 %v339, %v331
    %v341 = vadd.f32 %v340, %v335
    %v342 = vadd.f32 %v324, %v328
    %v343 = vadd.f32 %v342, %v332
    %v344 = vadd.f32 %v343, %v336
    %v345 = vadd.f32 %v325, %v329
    %v346 = vadd.f32 %v345, %v333
    %v347 = vadd.f32 %v346, %v337
    %v348 = vadd.f32 %v326, %v330
    %v349 = vadd.f32 %v348, %v334
    %v350 = vadd.f32 %v349, %v338
    %v351 = vadd.f32 %v71, %v341
    %v352 = vadd.f32 %v72, %v344
    %v353 = vadd.f32 %v73, %v347
    %v354 = vadd.f32 %v74, %v350
    %v355 = vadd.f32 %v89, %v93
    %v356 = vadd.f32 %v355, %v97
    %v357 = vadd.f32 %v356, %v101
    %v358 = vadd.f32 %v90, %v94
    %v359 = vadd.f32 %v358, %v98
    %v360 = vadd.f32 %v359, %v102
    %v361 = vadd.f32 %v91, %v95
    %v362 = vadd.f32 %v361, %v99
    %v363 = vadd.f32 %v362, %v103
    %v364 = vadd.f32 %v92, %v96
    %v365 = vadd.f32 %v364, %v100
    %v366 = vadd.f32 %v365, %v104
    %v367 = vadd.f32 %v75, %v357
    %v368 = vadd.f32 %v76, %v360
    %v369 = vadd.f32 %v77, %v363
    %v370 = vadd.f32 %v78, %v366
    %v371 = vadd.f32 %v115, %v119
    %v372 = vadd.f32 %v371, %v123
    %v373 = vadd.f32 %v372, %v127
    %v374 = vadd.f32 %v116, %v120
    %v375 = vadd.f32 %v374, %v124
    %v376 = vadd.f32 %v375, %v128
    %v377 = vadd.f32 %v117, %v121
    %v378 = vadd.f32 %v377, %v125
    %v379 = vadd.f32 %v378, %v129
    %v380 = vadd.f32 %v118, %v122
    %v381 = vadd.f32 %v380, %v126
    %v382 = vadd.f32 %v381, %v130
    %v383 = vadd.f32 %v79, %v373
    %v384 = vadd.f32 %v80, %v376
    %v385 = vadd.f32 %v81, %v379
    %v386 = vadd.f32 %v82, %v382
  $region14: #{forgery_detection_loss.2} parent=0 // loop_footer
    %s66 = sadd.s32 1, %s62
  $region15: #{forgery_detection_loss.2} parent=0 // loop_footer_branch
    %61 = sbr.rel target = $region11
  $region16: #{forgery_detection_loss.2} parent=0 // loop_exit
    _
  %p387 = scmp.eq.s32.totalorder 0, 0
  // Predicated region
  $region17: #{forgery_detection_loss.2} parent=0 // pred_check
    %p388 = pneg %p387
  $region18: #{forgery_detection_loss.2} parent=0 // pred_check_branch
    %390 = sbr.rel (%p388) target = $region20
  $region19: #{forgery_detection_loss.2} parent=0 // pred_region
    %391 = vst [vmem:[%s2] sm:$0xff] 0.0
    %392 = vst [vmem:[%s2 + $0x8] sm:$0xff] 0.0
    %393 = vst [vmem:[%s2 + $0x10] sm:$0xff] 0.0
    %394 = vst [vmem:[%s2 + $0x18] sm:$0xff] 0.0
    %395 = vst [vmem:[%s2 + $0x20] sm:$0xff] 0.0
    %396 = vst [vmem:[%s2 + $0x28] sm:$0xff] 0.0
    %397 = vst [vmem:[%s2 + $0x30] sm:$0xff] 0.0
    %398 = vst [vmem:[%s2 + $0x38] sm:$0xff] 0.0
    %399 = vst [vmem:[%s2 + $0x40] sm:$0xff] 0.0
    %400 = vst [vmem:[%s2 + $0x48] sm:$0xff] 0.0
    %401 = vst [vmem:[%s2 + $0x50] sm:$0xff] 0.0
    %402 = vst [vmem:[%s2 + $0x58] sm:$0xff] 0.0
    %403 = vst [vmem:[%s2 + $0x60] sm:$0xff] 0.0
    %404 = vst [vmem:[%s2 + $0x68] sm:$0xff] 0.0
    %405 = vst [vmem:[%s2 + $0x70] sm:$0xff] 0.0
    %406 = vst [vmem:[%s2 + $0x78] sm:$0xff] 0.0
  $region20: #{forgery_detection_loss.2} parent=0 // pred_fallthru
    _
  %v407 = vld [vmem:[%s2] sm:$0xff]
  %v408 = vld [vmem:[%s2 + $0x8] sm:$0xff]
  %v409 = vld [vmem:[%s2 + $0x10] sm:$0xff]
  %v410 = vld [vmem:[%s2 + $0x18] sm:$0xff]
  %v411 = vadd.f32 %v407, %v67
  %v412 = vadd.f32 %v408, %v68
  %v413 = vadd.f32 %v409, %v69
  %v414 = vadd.f32 %v410, %v70
  %415 = vst [vmem:[%s2] sm:$0xff] %v411
  %416 = vst [vmem:[%s2 + $0x8] sm:$0xff] %v412
  %417 = vst [vmem:[%s2 + $0x10] sm:$0xff] %v413
  %418 = vst [vmem:[%s2 + $0x18] sm:$0xff] %v414
  %s419 = scalar_lea.vmem %s2, 32
  %v420 = vld [vmem:[%s419] sm:$0xff]
  %v421 = vld [vmem:[%s419 + $0x8] sm:$0xff]
  %v422 = vld [vmem:[%s419 + $0x10] sm:$0xff]
  %v423 = vld [vmem:[%s419 + $0x18] sm:$0xff]
  %v424 = vadd.f32 %v420, %v71
  %v425 = vadd.f32 %v421, %v72
  %v426 = vadd.f32 %v422, %v73
  %v427 = vadd.f32 %v423, %v74
  %428 = vst [vmem:[%s419] sm:$0xff] %v424
  %429 = vst [vmem:[%s419 + $0x8] sm:$0xff] %v425
  %430 = vst [vmem:[%s419 + $0x10] sm:$0xff] %v426
  %431 = vst [vmem:[%s419 + $0x18] sm:$0xff] %v427
  %s432 = scalar_lea.vmem %s2, 64
  %v433 = vld [vmem:[%s432] sm:$0xff]
  %v434 = vld [vmem:[%s432 + $0x8] sm:$0xff]
  %v435 = vld [vmem:[%s432 + $0x10] sm:$0xff]
  %v436 = vld [vmem:[%s432 + $0x18] sm:$0xff]
  %v437 = vadd.f32 %v433, %v75
  %v438 = vadd.f32 %v434, %v76
  %v439 = vadd.f32 %v435, %v77
  %v440 = vadd.f32 %v436, %v78
  %441 = vst [vmem:[%s432] sm:$0xff] %v437
  %442 = vst [vmem:[%s432 + $0x8] sm:$0xff] %v438
  %443 = vst [vmem:[%s432 + $0x10] sm:$0xff] %v439
  %444 = vst [vmem:[%s432 + $0x18] sm:$0xff] %v440
  %s445 = scalar_lea.vmem %s2, 96
  %v446 = vld [vmem:[%s445] sm:$0xff]
  %v447 = vld [vmem:[%s445 + $0x8] sm:$0xff]
  %v448 = vld [vmem:[%s445 + $0x10] sm:$0xff]
  %v449 = vld [vmem:[%s445 + $0x18] sm:$0xff]
  %v450 = vadd.f32 %v446, %v79
  %v451 = vadd.f32 %v447, %v80
  %v452 = vadd.f32 %v448, %v81
  %v453 = vadd.f32 %v449, %v82
  %454 = vst [vmem:[%s445] sm:$0xff] %v450
  %455 = vst [vmem:[%s445 + $0x8] sm:$0xff] %v451
  %456 = vst [vmem:[%s445 + $0x10] sm:$0xff] %v452
  %457 = vst [vmem:[%s445 + $0x18] sm:$0xff] %v453
  // Predicated region
  $region21: #{forgery_detection_loss.2} parent=0 // pred_check
    _
  $region22: #{forgery_detection_loss.2} parent=0 // pred_check_branch
    %459 = sbr.rel (0) target = $region24
  $region23: #{forgery_detection_loss.2} parent=0 // pred_region
    _
  $region24: #{forgery_detection_loss.2} parent=0 // pred_fallthru
    _
  // Predicated region
  $region25: #{forgery_detection_loss.2} parent=0 // pred_check
    _
  $region26: #{forgery_detection_loss.2} parent=0 // pred_check_branch
    %461 = sbr.rel (0) target = $region28
  $region27: #{forgery_detection_loss.2} parent=0 // pred_region
    _
  $region28: #{forgery_detection_loss.2} parent=0 // pred_fallthru
    _

// kernel: forgery_detection_loss.3
$region0: #{forgery_detection_loss.3}
  #allocation0 [shape = 'u32[]', space=smem, size = 0x4, offset = 0x4, fixed_abs, tag = 'smem constant byte address 0x4 - core index']
  #allocation1 [shape = 'u32[144,128]{1,0:T(1,128)}', space=vmem, size = 0x12000, scoped, tag = 'internal scratch']
  %s0 = inlined_call_operand.vmem [shape: bf16[64,512], index: 0, kind: input, shape index: {}]
  %s1 = inlined_call_operand.vmem [shape: bf16[64,512], index: 1, kind: input, shape index: {}]
  %s2 = inlined_call_operand.vmem [shape: f32[1,8,512], index: 2, kind: output, shape index: {}]
  %s3 = sld [smem:[#allocation0]]
  $region29: #{forgery_detection_loss.3} parent=0
    _
  %s5 = ssub.s32 1, %s3
  %s6 = scalar_select 0, %s5, %s3
  // Predicated region
  $region2: #{forgery_detection_loss.3} parent=0 // pred_check
    _
  $region3: #{forgery_detection_loss.3} parent=0 // pred_check_branch
    %8 = sbr.rel (0) target = $region5
  $region4: #{forgery_detection_loss.3} parent=0 // pred_region
    %s9 = sadd.s32 0, 0
    %s10 = smul.u32 8, %s9
    %p11 = scmp.lt.s32.totalorder %s10, 7
    %s12 = scalar_select %p11, %s10, 7
    %s13 = smul.addr %s12, 4
    %s14 = smul.addr %s13, 4
    %s15 = scalar_lea.vmem %s0, %s14
    %s16 = sadd.s32 0, 0
    %s17 = smul.u32 8, %s16
  $region5: #{forgery_detection_loss.3} parent=0 // pred_fallthru
    _
  // Predicated region
  $region6: #{forgery_detection_loss.3} parent=0 // pred_check
    _
  $region7: #{forgery_detection_loss.3} parent=0 // pred_check_branch
    %19 = sbr.rel (0) target = $region9
  $region8: #{forgery_detection_loss.3} parent=0 // pred_region
    %s20 = sadd.s32 0, 0
    %s21 = smul.u32 8, %s20
    %p22 = scmp.lt.s32.totalorder %s21, 7
    %s23 = scalar_select %p22, %s21, 7
    %s24 = smul.addr %s23, 4
    %s25 = smul.addr %s24, 4
    %s26 = scalar_lea.vmem %s1, %s25
    %s27 = sadd.s32 0, 0
    %s28 = smul.u32 8, %s27
  $region9: #{forgery_detection_loss.3} parent=0 // pred_fallthru
    _
  %s29 = sadd.s32 0, 0
  %s30 = smul.u32 8, %s29
  %p31 = scmp.lt.s32.totalorder %s30, 7
  %s32 = scalar_select %p31, %s30, 7
  %s33 = smul.addr %s32, 4
  %s34 = smul.addr %s33, 4
  %s35 = scalar_lea.vmem %s0, %s34
  %s36 = sadd.s32 0, 0
  %s37 = smul.u32 8, %s36
  %p38 = scmp.lt.s32.totalorder %s37, 7
  %s39 = scalar_select %p38, %s37, 7
  %s40 = smul.addr %s39, 4
  %s41 = smul.addr %s40, 4
  %s42 = scalar_lea.vmem %s1, %s41
  %s43 = sadd.s32 0, 0
  %s44 = smul.u32 8, %s43
  %p45 = scmp.lt.s32.totalorder %s44, 7
  %s46 = scalar_select %p45, %s44, 7
  %s47 = smul.addr %s46, 4
  %s48 = smul.addr %s47, 4
  %s49 = scalar_lea.vmem %s0, %s48
  %s50 = sadd.s32 0, 0
  %s51 = smul.u32 8, %s50
  %s52 = sadd.s32 0, 0
  %s53 = smul.u32 8, %s52
  %p54 = scmp.lt.s32.totalorder %s53, 7
  %s55 = scalar_select %p54, %s53, 7
  %s56 = smul.addr %s55, 4
  %s57 = smul.addr %s56, 4
  %s58 = scalar_lea.vmem %s1, %s57
  %s59 = sadd.s32 0, 0
  %s60 = smul.u32 8, %s59
  loop: start=0, step=1, limit=2
  $region10: #{forgery_detection_loss.3} parent=0 // loop_pre_header
    _
  $region11: #{forgery_detection_loss.3} parent=0 // loop_header
    %s62 = sphi 0, %s66
    %p63 = scmp.ge.s32.totalorder %s62, 2
    %v67 = vphi 0.0, %v187
    %v68 = vphi 0.0, %v188
    %v69 = vphi 0.0, %v189
    %v70 = vphi 0.0, %v190
  $region12: #{forgery_detection_loss.3} parent=0 // loop_header_branch
    %65 = sbr.rel (%p63) target = $region16
  $region13: #{forgery_detection_loss.3} parent=0 // loop_body
    %s71 = smul.u32 %s62, 32
    %s72 = sshra.s32 %s71, 3
    %s73 = sand.u32 %s71, 7
    %s74 = smul.u32 %s72, 4
    %s75 = smul.addr %s74, 4
    %s76 = scalar_lea.vmem %s49, %s75
    %v77 = vld [vmem:[%s76] sm:$0xff]
    %v78 = vld [vmem:[%s76 + $0x8] sm:$0xff]
    %v79 = vld [vmem:[%s76 + $0x10] sm:$0xff]
    %v80 = vld [vmem:[%s76 + $0x18] sm:$0xff]
    %v81 = vld [vmem:[%s76 + $0x20] sm:$0xff]
    %v82 = vld [vmem:[%s76 + $0x28] sm:$0xff]
    %v83 = vld [vmem:[%s76 + $0x30] sm:$0xff]
    %v84 = vld [vmem:[%s76 + $0x38] sm:$0xff]
    %v85 = vunpack.c.l.bf16 %v77
    %v86 = vunpack.c.h.bf16 %v77
    %v87 = vunpack.c.l.bf16 %v78
    %v88 = vunpack.c.h.bf16 %v78
    %v89 = vunpack.c.l.bf16 %v79
    %v90 = vunpack.c.h.bf16 %v79
    %v91 = vunpack.c.l.bf16 %v80
    %v92 = vunpack.c.h.bf16 %v80
    %v93 = vunpack.c.l.bf16 %v81
    %v94 = vunpack.c.h.bf16 %v81
    %v95 = vunpack.c.l.bf16 %v82
    %v96 = vunpack.c.h.bf16 %v82
    %v97 = vunpack.c.l.bf16 %v83
    %v98 = vunpack.c.h.bf16 %v83
    %v99 = vunpack.c.l.bf16 %v84
    %v100 = vunpack.c.h.bf16 %v84
    %v101 = vand.u32 2147483647, %v85
    %v102 = vand.u32 2147483647, %v86
    %v103 = vand.u32 2147483647, %v87
    %v104 = vand.u32 2147483647, %v88
    %v105 = vand.u32 2147483647, %v89
    %v106 = vand.u32 2147483647, %v90
    %v107 = vand.u32 2147483647, %v91
    %v108 = vand.u32 2147483647, %v92
    %v109 = vand.u32 2147483647, %v93
    %v110 = vand.u32 2147483647, %v94
    %v111 = vand.u32 2147483647, %v95
    %v112 = vand.u32 2147483647, %v96
    %v113 = vand.u32 2147483647, %v97
    %v114 = vand.u32 2147483647, %v98
    %v115 = vand.u32 2147483647, %v99
    %v116 = vand.u32 2147483647, %v100
    %s117 = smul.addr %s74, 4
    %s118 = scalar_lea.vmem %s58, %s117
    %v119 = vld [vmem:[%s118] sm:$0xff]
    %v120 = vld [vmem:[%s118 + $0x8] sm:$0xff]
    %v121 = vld [vmem:[%s118 + $0x10] sm:$0xff]
    %v122 = vld [vmem:[%s118 + $0x18] sm:$0xff]
    %v123 = vld [vmem:[%s118 + $0x20] sm:$0xff]
    %v124 = vld [vmem:[%s118 + $0x28] sm:$0xff]
    %v125 = vld [vmem:[%s118 + $0x30] sm:$0xff]
    %v126 = vld [vmem:[%s118 + $0x38] sm:$0xff]
    %v127 = vunpack.c.l.bf16 %v119
    %v128 = vunpack.c.h.bf16 %v119
    %v129 = vunpack.c.l.bf16 %v120
    %v130 = vunpack.c.h.bf16 %v120
    %v131 = vunpack.c.l.bf16 %v121
    %v132 = vunpack.c.h.bf16 %v121
    %v133 = vunpack.c.l.bf16 %v122
    %v134 = vunpack.c.h.bf16 %v122
    %v135 = vunpack.c.l.bf16 %v123
    %v136 = vunpack.c.h.bf16 %v123
    %v137 = vunpack.c.l.bf16 %v124
    %v138 = vunpack.c.h.bf16 %v124
    %v139 = vunpack.c.l.bf16 %v125
    %v140 = vunpack.c.h.bf16 %v125
    %v141 = vunpack.c.l.bf16 %v126
    %v142 = vunpack.c.h.bf16 %v126
    %v143 = vand.u32 2147483647, %v127
    %v144 = vand.u32 2147483647, %v128
    %v145 = vand.u32 2147483647, %v129
    %v146 = vand.u32 2147483647, %v130
    %v147 = vand.u32 2147483647, %v131
    %v148 = vand.u32 2147483647, %v132
    %v149 = vand.u32 2147483647, %v133
    %v150 = vand.u32 2147483647, %v134
    %v151 = vand.u32 2147483647, %v135
    %v152 = vand.u32 2147483647, %v136
    %v153 = vand.u32 2147483647, %v137
    %v154 = vand.u32 2147483647, %v138
    %v155 = vand.u32 2147483647, %v139
    %v156 = vand.u32 2147483647, %v140
    %v157 = vand.u32 2147483647, %v141
    %v158 = vand.u32 2147483647, %v142
    %v159 = vadd.f32 %v101, %v143
    %v160 = vadd.f32 %v102, %v144
    %v161 = vadd.f32 %v103, %v145
    %v162 = vadd.f32 %v104, %v146
    %v163 = vadd.f32 %v105, %v147
    %v164 = vadd.f32 %v106, %v148
    %v165 = vadd.f32 %v107, %v149
    %v166 = vadd.f32 %v108, %v150
    %v167 = vadd.f32 %v109, %v151
    %v168 = vadd.f32 %v110, %v152
    %v169 = vadd.f32 %v111, %v153
    %v170 = vadd.f32 %v112, %v154
    %v171 = vadd.f32 %v113, %v155
    %v172 = vadd.f32 %v114, %v156
    %v173 = vadd.f32 %v115, %v157
    %v174 = vadd.f32 %v116, %v158
    %v175 = vadd.f32 %v159, %v163
    %v176 = vadd.f32 %v175, %v167
    %v177 = vadd.f32 %v176, %v171
    %v178 = vadd.f32 %v160, %v164
    %v179 = vadd.f32 %v178, %v168
    %v180 = vadd.f32 %v179, %v172
    %v181 = vadd.f32 %v161, %v165
    %v182 = vadd.f32 %v181, %v169
    %v183 = vadd.f32 %v182, %v173
    %v184 = vadd.f32 %v162, %v166
    %v185 = vadd.f32 %v184, %v170
    %v186 = vadd.f32 %v185, %v174
    %v187 = vadd.f32 %v67, %v177
    %v188 = vadd.f32 %v68, %v180
    %v189 = vadd.f32 %v69, %v183
    %v190 = vadd.f32 %v70, %v186
  $region14: #{forgery_detection_loss.3} parent=0 // loop_footer
    %s66 = sadd.s32 1, %s62
  $region15: #{forgery_detection_loss.3} parent=0 // loop_footer_branch
    %61 = sbr.rel target = $region11
  $region16: #{forgery_detection_loss.3} parent=0 // loop_exit
    _
  %p191 = scmp.eq.s32.totalorder 0, 0
  // Predicated region
  $region17: #{forgery_detection_loss.3} parent=0 // pred_check
    %p192 = pneg %p191
  $region18: #{forgery_detection_loss.3} parent=0 // pred_check_branch
    %194 = sbr.rel (%p192) target = $region20
  $region19: #{forgery_detection_loss.3} parent=0 // pred_region
    %195 = vst [vmem:[%s2] sm:$0xff] 0.0
    %196 = vst [vmem:[%s2 + $0x8] sm:$0xff] 0.0
    %197 = vst [vmem:[%s2 + $0x10] sm:$0xff] 0.0
    %198 = vst [vmem:[%s2 + $0x18] sm:$0xff] 0.0
  $region20: #{forgery_detection_loss.3} parent=0 // pred_fallthru
    _
  %v199 = vld [vmem:[%s2] sm:$0xff]
  %v200 = vld [vmem:[%s2 + $0x8] sm:$0xff]
  %v201 = vld [vmem:[%s2 + $0x10] sm:$0xff]
  %v202 = vld [vmem:[%s2 + $0x18] sm:$0xff]
  %v203 = vadd.f32 %v199, %v67
  %v204 = vadd.f32 %v200, %v68
  %v205 = vadd.f32 %v201, %v69
  %v206 = vadd.f32 %v202, %v70
  %207 = vst [vmem:[%s2] sm:$0xff] %v203
  %208 = vst [vmem:[%s2 + $0x8] sm:$0xff] %v204
  %209 = vst [vmem:[%s2 + $0x10] sm:$0xff] %v205
  %210 = vst [vmem:[%s2 + $0x18] sm:$0xff] %v206
  // Predicated region
  $region21: #{forgery_detection_loss.3} parent=0 // pred_check
    _
  $region22: #{forgery_detection_loss.3} parent=0 // pred_check_branch
    %212 = sbr.rel (0) target = $region24
  $region23: #{forgery_detection_loss.3} parent=0 // pred_region
    _
  $region24: #{forgery_detection_loss.3} parent=0 // pred_fallthru
    _
  // Predicated region
  $region25: #{forgery_detection_loss.3} parent=0 // pred_check
    _
  $region26: #{forgery_detection_loss.3} parent=0 // pred_check_branch
    %214 = sbr.rel (0) target = $region28
  $region27: #{forgery_detection_loss.3} parent=0 // pred_region
    _
  $region28: #{forgery_detection_loss.3} parent=0 // pred_fallthru
    _

</llo_original>
